<compile_context>
chip_gen: v7x
topology: tpu7x:2x2x1
jax: 0.10.0
libtpu: 0.0.40
codegen_flags: <defaults>
</compile_context>

<pallas_src>
import functools

import jax
import jax.numpy as jnp
import numpy as np
from jax.experimental import pallas as pl
from jax.experimental.pallas import tpu as pltpu


def _image_sample_kernel(xs_ref, img_ref, out_ref, *, H, W, C, scale):
    # xs_ref : (2, TN)   row 0 = normalized x, row 1 = normalized y
    # img_ref: (C*H, W)  channel-major rows: row c*H + y holds data[y, :, c]
    # out_ref: (C, TN)
    xs = xs_ref[...]                                    # (2, TN) float32
    tn = xs.shape[1]

    # xs * [shape[1], shape[0]]  ==  [x*W, y*H]
    x = xs[0:1, :] * jnp.float32(W)                     # (1, TN)
    y = xs[1:2, :] * jnp.float32(H)                     # (1, TN)

    # .long() truncates toward zero (== astype(int32) on TPU)
    ix = x.astype(jnp.int32)
    iy = y.astype(jnp.int32)
    # indices = indices - indices % scale
    ix = ix - ix % scale
    iy = iy - iy % scale

    # lerp weights from the *unclamped* snapped indices (as in torch)
    wx = (x - ix.astype(jnp.float32)) / jnp.float32(scale)    # (1, TN)
    wy = (y - iy.astype(jnp.float32)) / jnp.float32(scale)    # (1, TN)

    x0 = jnp.clip(ix, 0, W - 1)
    y0 = jnp.clip(iy, 0, H - 1)
    x1 = jnp.minimum(x0 + scale, W - 1)
    y1 = jnp.minimum(y0 + scale, H - 1)

    # Separable one-hot + lerp matrices: O(W + H) work per query instead of
    # O(H*W).  Edge clamping (x0 == x1) simply accumulates (1-wx) + wx = 1,
    # exactly matching the torch expression.
    iota_x = jax.lax.broadcasted_iota(jnp.int32, (W, tn), 0)
    iota_y = jax.lax.broadcasted_iota(jnp.int32, (H, tn), 0)
    ax = (jnp.where(iota_x == x0, 1.0 - wx, 0.0)
          + jnp.where(iota_x == x1, wx, 0.0))           # (W, TN)
    ay = (jnp.where(iota_y == y0, 1.0 - wy, 0.0)
          + jnp.where(iota_y == y1, wy, 0.0))           # (H, TN)

    # Stage 1 (MXU): x-gather + x-lerp for every (c, y) row in one matmul.
    g = jnp.dot(img_ref[...], ax,
                preferred_element_type=jnp.float32)     # (C*H, TN)

    # Stage 2 (VPU + XLU): y-lerp -- scale each y-row by ay and reduce over H.
    # (C*H, TN) -> (C, H, TN) is a tile-aligned view when H % 8 == 0; for other
    # H it may insert a small VMEM copy, which is still tiny next to the matmul.
    g3 = g.reshape(C, H, tn)
    out_ref[...] = jnp.sum(g3 * ay[None, :, :], axis=1)  # (C, TN)


def image_sample(xs, data, scale, *, tile_n=128):
    """Pallas equivalent of Image.forward.

    xs   : (N, 2) float32, normalized coords in [0, 1]
    data : (H, W, C) float32 image
    scale: python int (static)
    Returns (N, C) float32.
    """
    H, W, C = data.shape
    N = xs.shape[0]

    # Pad the query count up to a multiple of tile_n (robustness); padded
    # queries sample pixel (0, 0) and are sliced off afterwards.
    n_pad = (-N) % tile_n
    xs_p = jnp.pad(xs, ((0, n_pad), (0, 0))) if n_pad else xs
    Np = N + n_pad

    # Layout plumbing outside the kernel (cheap, one-time):
    #   image -> (C*H, W) channel-major rows, queries -> (2, N) lane-dense.
    img_rows = jnp.transpose(data, (2, 0, 1)).reshape(C * H, W)
    xs_t = xs_p.T                                       # (2, Np)

    kernel = functools.partial(_image_sample_kernel,
                               H=H, W=W, C=C, scale=int(scale))

    out_cn = pl.pallas_call(
        kernel,
        out_shape=jax.ShapeDtypeStruct((C, Np), jnp.float32),
        grid_spec=pltpu.PrefetchScalarGridSpec(
            num_scalar_prefetch=0,
            grid=(Np // tile_n,),
            in_specs=[
                pl.BlockSpec((2, tile_n), lambda i: (0, i)),     # coords tile
                pl.BlockSpec((C * H, W), lambda i: (0, 0)),      # full image (grid-invariant)
            ],
            out_specs=pl.BlockSpec((C, tile_n), lambda i: (0, i)),
        ),
        compiler_params=pltpu.CompilerParams(
            dimension_semantics=("parallel",)),
    )(xs_t, img_rows)

    return out_cn[:, :N].T                              # (N, C)


def image_sample_ref(xs, data, scale):
    """Pure-JAX reference mirroring the PyTorch forward, for validation."""
    H, W, _ = data.shape
    xs = xs * jnp.array([W, H], dtype=jnp.float32)
    indices = xs.astype(jnp.int32)
    indices = indices - indices % scale
    lerp = (xs - indices.astype(jnp.float32)) / scale
    x0 = jnp.clip(indices[:, 0], 0, W - 1)
    y0 = jnp.clip(indices[:, 1], 0, H - 1)
    x1 = jnp.minimum(x0 + scale, W - 1)
    y1 = jnp.minimum(y0 + scale, H - 1)
    wx = lerp[:, 0:1]
    wy = lerp[:, 1:2]
    return (data[y0, x0] * (1.0 - wx) * (1.0 - wy)
            + data[y0, x1] * wx * (1.0 - wy)
            + data[y1, x0] * (1.0 - wx) * wy
            + data[y1, x1] * wx * wy)


if __name__ == "__main__":
    key = jax.random.PRNGKey(0)
    k_img, k_xs = jax.random.split(key)

    H, W, C = 16, 16, 3          # synthetic "read_image" result (H, W, C)
    scale = 2
    N = 512                      # multiple grid steps -> both TCs used on v7x
    tile_n = 128

    # Deterministic synthetic image (stands in for the file read in __init__).
    data = jax.random.uniform(k_img, (H, W, C), dtype=jnp.float32)
    # Query coordinates in [0, 1).
    xs = jax.random.uniform(k_xs, (N, 2), dtype=jnp.float32)

    out = image_sample(xs, data, scale, tile_n=tile_n)
    out = jax.block_until_ready(out)

    ref = jax.block_until_ready(image_sample_ref(xs, data, scale))
    np.testing.assert_allclose(np.asarray(out), np.asarray(ref), rtol=1e-5, atol=1e-5)

    print("KERNEL_OK")
</pallas_src>

<mosaic_0001>
module attributes {stable_mosaic.version = 11 : i64} {
  func.func @_image_sample_kernel(%arg0: i32, %arg1: memref<2x128xf32, #tpu.memory_space<vmem>>, %arg2: memref<48x16xf32, #tpu.memory_space<vmem>>, %arg3: memref<3x128xf32, #tpu.memory_space<vmem>>) attributes {dimension_semantics = [#tpu.dimension_semantics<parallel>], iteration_bounds = array<i64: 4>, scalar_prefetch = 0 : i64, scratch_operands = 0 : i64, tpu.core_type = #tpu.core_type<tc>, window_params = [{transform_indices = @transform_0, window_bounds = array<i64: 2, 128>}, {pipeline_mode = #tpu.pipeline_mode<synchronous>, transform_indices = @transform_1, window_bounds = array<i64: 48, 16>}, {transform_indices = @transform_2, window_bounds = array<i64: 3, 128>}]} {
    %c0 = arith.constant 0 : index
    %c0_0 = arith.constant 0 : index
    %0 = vector.load %arg1[%c0, %c0_0] : memref<2x128xf32, #tpu.memory_space<vmem>>, vector<2x128xf32>
    %1 = vector.extract_strided_slice %0 {offsets = [0, 0], sizes = [1, 128], strides = [1, 1]} : vector<2x128xf32> to vector<1x128xf32>
    %cst = arith.constant 1.600000e+01 : f32
    %2 = vector.broadcast %cst : f32 to vector<1x128xf32>
    %3 = arith.mulf %1, %2 : vector<1x128xf32>
    %4 = vector.extract_strided_slice %0 {offsets = [1, 0], sizes = [1, 128], strides = [1, 1]} : vector<2x128xf32> to vector<1x128xf32>
    %cst_1 = arith.constant 1.600000e+01 : f32
    %5 = vector.broadcast %cst_1 : f32 to vector<1x128xf32>
    %6 = arith.mulf %4, %5 : vector<1x128xf32>
    %7 = arith.fptosi %3 : vector<1x128xf32> to vector<1x128xi32>
    %8 = arith.fptosi %6 : vector<1x128xf32> to vector<1x128xi32>
    %c2_i32 = arith.constant 2 : i32
    %c0_i32 = arith.constant 0 : i32
    %9 = arith.cmpi eq, %c2_i32, %c0_i32 : i32
    %c1_i32 = arith.constant 1 : i32
    %10 = arith.select %9, %c1_i32, %c2_i32 : i32
    %11 = vector.broadcast %10 : i32 to vector<1x128xi32>
    %12 = arith.remsi %7, %11 : vector<1x128xi32>
    %c0_i32_2 = arith.constant 0 : i32
    %13 = vector.broadcast %c0_i32_2 : i32 to vector<1x128xi32>
    %14 = arith.cmpi ne, %12, %13 : vector<1x128xi32>
    %c0_i32_3 = arith.constant 0 : i32
    %15 = vector.broadcast %c0_i32_3 : i32 to vector<1x128xi32>
    %16 = arith.cmpi slt, %12, %15 : vector<1x128xi32>
    %c0_i32_4 = arith.constant 0 : i32
    %17 = arith.cmpi slt, %10, %c0_i32_4 : i32
    %18 = vector.broadcast %17 : i1 to vector<1x128xi1>
    %19 = vector.broadcast %18 : vector<1x128xi1> to vector<1x128xi1>
    %20 = arith.xori %16, %19 : vector<1x128xi1>
    %21 = arith.andi %20, %14 : vector<1x128xi1>
    %22 = vector.broadcast %10 : i32 to vector<1x128xi32>
    %23 = arith.addi %12, %22 : vector<1x128xi32>
    %24 = arith.select %21, %23, %12 : vector<1x128xi1>, vector<1x128xi32>
    %25 = arith.subi %7, %24 : vector<1x128xi32>
    %c2_i32_5 = arith.constant 2 : i32
    %c0_i32_6 = arith.constant 0 : i32
    %26 = arith.cmpi eq, %c2_i32_5, %c0_i32_6 : i32
    %c1_i32_7 = arith.constant 1 : i32
    %27 = arith.select %26, %c1_i32_7, %c2_i32_5 : i32
    %28 = vector.broadcast %27 : i32 to vector<1x128xi32>
    %29 = arith.remsi %8, %28 : vector<1x128xi32>
    %c0_i32_8 = arith.constant 0 : i32
    %30 = vector.broadcast %c0_i32_8 : i32 to vector<1x128xi32>
    %31 = arith.cmpi ne, %29, %30 : vector<1x128xi32>
    %c0_i32_9 = arith.constant 0 : i32
    %32 = vector.broadcast %c0_i32_9 : i32 to vector<1x128xi32>
    %33 = arith.cmpi slt, %29, %32 : vector<1x128xi32>
    %c0_i32_10 = arith.constant 0 : i32
    %34 = arith.cmpi slt, %27, %c0_i32_10 : i32
    %35 = vector.broadcast %34 : i1 to vector<1x128xi1>
    %36 = vector.broadcast %35 : vector<1x128xi1> to vector<1x128xi1>
    %37 = arith.xori %33, %36 : vector<1x128xi1>
    %38 = arith.andi %37, %31 : vector<1x128xi1>
    %39 = vector.broadcast %27 : i32 to vector<1x128xi32>
    %40 = arith.addi %29, %39 : vector<1x128xi32>
    %41 = arith.select %38, %40, %29 : vector<1x128xi1>, vector<1x128xi32>
    %42 = arith.subi %8, %41 : vector<1x128xi32>
    %43 = arith.sitofp %25 : vector<1x128xi32> to vector<1x128xf32>
    %44 = arith.subf %3, %43 : vector<1x128xf32>
    %cst_11 = arith.constant 2.000000e+00 : f32
    %45 = vector.broadcast %cst_11 : f32 to vector<1x128xf32>
    %46 = arith.divf %44, %45 : vector<1x128xf32>
    %47 = arith.sitofp %42 : vector<1x128xi32> to vector<1x128xf32>
    %48 = arith.subf %6, %47 : vector<1x128xf32>
    %cst_12 = arith.constant 2.000000e+00 : f32
    %49 = vector.broadcast %cst_12 : f32 to vector<1x128xf32>
    %50 = arith.divf %48, %49 : vector<1x128xf32>
    %c0_i32_13 = arith.constant 0 : i32
    %c15_i32 = arith.constant 15 : i32
    %51 = vector.broadcast %c0_i32_13 : i32 to vector<1x128xi32>
    %52 = arith.maxsi %51, %25 : vector<1x128xi32>
    %53 = vector.broadcast %c15_i32 : i32 to vector<1x128xi32>
    %54 = arith.minsi %53, %52 : vector<1x128xi32>
    %c0_i32_14 = arith.constant 0 : i32
    %c15_i32_15 = arith.constant 15 : i32
    %55 = vector.broadcast %c0_i32_14 : i32 to vector<1x128xi32>
    %56 = arith.maxsi %55, %42 : vector<1x128xi32>
    %57 = vector.broadcast %c15_i32_15 : i32 to vector<1x128xi32>
    %58 = arith.minsi %57, %56 : vector<1x128xi32>
    %c2_i32_16 = arith.constant 2 : i32
    %59 = vector.broadcast %c2_i32_16 : i32 to vector<1x128xi32>
    %60 = arith.addi %54, %59 : vector<1x128xi32>
    %c15_i32_17 = arith.constant 15 : i32
    %61 = vector.broadcast %c15_i32_17 : i32 to vector<1x128xi32>
    %62 = arith.minsi %60, %61 : vector<1x128xi32>
    %c2_i32_18 = arith.constant 2 : i32
    %63 = vector.broadcast %c2_i32_18 : i32 to vector<1x128xi32>
    %64 = arith.addi %58, %63 : vector<1x128xi32>
    %c15_i32_19 = arith.constant 15 : i32
    %65 = vector.broadcast %c15_i32_19 : i32 to vector<1x128xi32>
    %66 = arith.minsi %64, %65 : vector<1x128xi32>
    %67 = tpu.iota {dimensions = array<i32: 0>} : vector<16x128xi32>
    %68 = tpu.iota {dimensions = array<i32: 0>} : vector<16x128xi32>
    %69 = vector.broadcast %54 : vector<1x128xi32> to vector<16x128xi32>
    %70 = arith.cmpi eq, %67, %69 : vector<16x128xi32>
    %cst_20 = arith.constant 1.000000e+00 : f32
    %71 = vector.broadcast %cst_20 : f32 to vector<1x128xf32>
    %72 = arith.subf %71, %46 : vector<1x128xf32>
    %cst_21 = arith.constant 0.000000e+00 : f32
    %73 = vector.shape_cast %72 : vector<1x128xf32> to vector<1x128xf32>
    %74 = vector.broadcast %73 : vector<1x128xf32> to vector<16x128xf32>
    %75 = vector.broadcast %cst_21 : f32 to vector<16x128xf32>
    %76 = arith.select %70, %74, %75 : vector<16x128xi1>, vector<16x128xf32>
    %77 = vector.broadcast %62 : vector<1x128xi32> to vector<16x128xi32>
    %78 = arith.cmpi eq, %67, %77 : vector<16x128xi32>
    %cst_22 = arith.constant 0.000000e+00 : f32
    %79 = vector.shape_cast %46 : vector<1x128xf32> to vector<1x128xf32>
    %80 = vector.broadcast %79 : vector<1x128xf32> to vector<16x128xf32>
    %81 = vector.broadcast %cst_22 : f32 to vector<16x128xf32>
    %82 = arith.select %78, %80, %81 : vector<16x128xi1>, vector<16x128xf32>
    %83 = arith.addf %76, %82 : vector<16x128xf32>
    %84 = vector.broadcast %58 : vector<1x128xi32> to vector<16x128xi32>
    %85 = arith.cmpi eq, %68, %84 : vector<16x128xi32>
    %cst_23 = arith.constant 1.000000e+00 : f32
    %86 = vector.broadcast %cst_23 : f32 to vector<1x128xf32>
    %87 = arith.subf %86, %50 : vector<1x128xf32>
    %cst_24 = arith.constant 0.000000e+00 : f32
    %88 = vector.shape_cast %87 : vector<1x128xf32> to vector<1x128xf32>
    %89 = vector.broadcast %88 : vector<1x128xf32> to vector<16x128xf32>
    %90 = vector.broadcast %cst_24 : f32 to vector<16x128xf32>
    %91 = arith.select %85, %89, %90 : vector<16x128xi1>, vector<16x128xf32>
    %92 = vector.broadcast %66 : vector<1x128xi32> to vector<16x128xi32>
    %93 = arith.cmpi eq, %68, %92 : vector<16x128xi32>
    %cst_25 = arith.constant 0.000000e+00 : f32
    %94 = vector.shape_cast %50 : vector<1x128xf32> to vector<1x128xf32>
    %95 = vector.broadcast %94 : vector<1x128xf32> to vector<16x128xf32>
    %96 = vector.broadcast %cst_25 : f32 to vector<16x128xf32>
    %97 = arith.select %93, %95, %96 : vector<16x128xi1>, vector<16x128xf32>
    %98 = arith.addf %91, %97 : vector<16x128xf32>
    %c0_26 = arith.constant 0 : index
    %c0_27 = arith.constant 0 : index
    %99 = vector.load %arg2[%c0_26, %c0_27] : memref<48x16xf32, #tpu.memory_space<vmem>>, vector<48x16xf32>
    %cst_28 = arith.constant dense<0.000000e+00> : vector<48x128xf32>
    %100 = tpu.matmul %99, %83, %cst_28 {dimension_numbers = #tpu.dot_dimension_numbers<[1], [0], [0], [1], [0, 0, 1, 1], [], []>} : vector<48x16xf32>, vector<16x128xf32>, vector<48x128xf32> -> vector<48x128xf32>
    %101 = vector.shape_cast %100 : vector<48x128xf32> to vector<3x16x128xf32>
    %102 = vector.shape_cast %98 : vector<16x128xf32> to vector<1x16x128xf32>
    %103 = vector.broadcast %102 : vector<1x16x128xf32> to vector<3x16x128xf32>
    %104 = arith.mulf %101, %103 : vector<3x16x128xf32>
    %cst_29 = arith.constant dense<0.000000e+00> : vector<3x128xf32>
    %105 = vector.multi_reduction <add>, %104, %cst_29 [1] : vector<3x16x128xf32> to vector<3x128xf32>
    %c0_30 = arith.constant 0 : index
    %c0_31 = arith.constant 0 : index
    %106 = vector.load %arg3[%c0_30, %c0_31] : memref<3x128xf32, #tpu.memory_space<vmem>>, vector<3x128xf32>
    tpu.vector_store %arg3[%c0_30, %c0_31], %105 {strides = array<i32>} : memref<3x128xf32, #tpu.memory_space<vmem>>, vector<3x128xf32>,
    return
  }
  func.func @transform_0(%arg0: i32) -> (i32, i32) {
    %c0_i32 = arith.constant 0 : i32
    %c0_i32_0 = arith.constant 0 : i32
    return %c0_i32, %arg0 : i32, i32
  }
  func.func @transform_1(%arg0: i32) -> (i32, i32) {
    %c0_i32 = arith.constant 0 : i32
    %c0_i32_0 = arith.constant 0 : i32
    %c0_i32_1 = arith.constant 0 : i32
    return %c0_i32, %c0_i32_0 : i32, i32
  }
  func.func @transform_2(%arg0: i32) -> (i32, i32) {
    %c0_i32 = arith.constant 0 : i32
    %c0_i32_0 = arith.constant 0 : i32
    return %c0_i32, %arg0 : i32, i32
  }
}

</mosaic_0001>

<llo_original>
// kernel: tpu_custom_call.1
$region0: #{tpu_custom_call.1}
  #allocation0 [shape = 'u32[]', space=smem, size = 0x4, offset = 0x4, fixed_abs, tag = 'smem constant byte address 0x4 - core index']
  #allocation1 [shape = 'u32[144,128]{1,0:T(1,128)}', space=vmem, size = 0x12000, scoped, tag = 'internal scratch']
  %s0 = inlined_call_operand.vmem [shape: f32[2,512], index: 0, kind: input, shape index: {}]
  %s1 = inlined_call_operand.vmem [shape: f32[48,16], index: 1, kind: input, shape index: {}]
  %s2 = inlined_call_operand.hbm [shape: f32[3,512], index: 2, kind: output, shape index: {}]
  %s3 = sld [smem:[#allocation0]]
  $region41: #{tpu_custom_call.1} parent=0
    _
  %s5 = ssub.s32 1, %s3
  %s6 = scalar_select 0, %s5, %s3
  $region1: #{tpu_custom_call.1} parent=0
    #allocation2 [shape = 'u8[4096]{0}', space=vmem, size = 0x1000, scoped, tag = 'output window, operand 0']
    #allocation3 [shape = 's32[2]{0}', space=sflag, size = 0x8, scoped, tag = 'scoped memory for tpu_custom_call.1']
    %7 = vsyncpa [#allocation3], 0
    %s8 = scalar_lea.sflag [#allocation3], 1
    %9 = vsyncpa %s8, 0
    loop: start=0, step=1, limit=6
    $region2: #{tpu_custom_call.1} parent=1 // loop_pre_header
      _
    $region3: #{tpu_custom_call.1} parent=1 // loop_header
      %s11 = sphi 0, %s15
      %p12 = scmp.ge.s32.totalorder %s11, 6
      %s21 = sphi 0, %s23
      %s24 = sphi 0, %s21
      %s25 = sphi 0, %s24
      %s41 = sphi 0, %s25
      %s45 = sphi 0, %s45
      %s47 = sphi 0, %s45
      %s48 = sphi 0, %s47
      %s62 = sphi 0, %s48
      %s68 = sphi 0, %s70
      %s71 = sphi 0, %s68
      %s72 = sphi 0, %s71
      %s88 = sphi 0, %s72
    $region4: #{tpu_custom_call.1} parent=1 // loop_header_branch
      %14 = sbr.rel (%p12) target = $region8
    $region5: #{tpu_custom_call.1} parent=1 // loop_body
      %s16 = ssub.s32 %s11, 1
      %s17 = ssub.s32 %s11, 2
      %s18 = sadd.s32 %s11, 1
      %s19 = ssub.s32 %s11, %s18
      %p20 = scmp.eq.s32.totalorder %s19, 0
      %s22 = sadd.s32 %s21, 1
      %s23 = scalar_select %p20, %s21, %s22
      %p26 = pneg %p20
      %p27 = scmp.eq.s32.totalorder %s11, 3
      %p28 = por %p26, %p27
      %p29 = scmp.ne.s32.totalorder %s21, %s24
      %p30 = scmp.eq.s32.totalorder %s11, 0
      %p31 = por %p29, %p30
      %p32 = scmp.ne.s32.totalorder %s21, %s24
      %p33 = scmp.eq.s32.totalorder %s16, 3
      %p34 = por %p32, %p33
      %p35 = scmp.ne.s32.totalorder %s24, %s25
      %p36 = scmp.eq.s32.totalorder %s16, 0
      %p37 = por %p35, %p36
      %p38 = scmp.ne.s32.totalorder %s24, %s25
      %p39 = scmp.eq.s32.totalorder %s17, 3
      %p40 = por %p38, %p39
      %p42 = scmp.ne.s32.totalorder %s25, %s41
      %p43 = scmp.eq.s32.totalorder %s17, 0
      %p44 = por %p42, %p43
      %s46 = sadd.s32 %s45, 1
      %p49 = scmp.eq.s32.totalorder %s11, 3
      %p50 = scmp.ne.s32.totalorder %s45, %s47
      %p51 = scmp.eq.s32.totalorder %s11, 0
      %p52 = por %p50, %p51
      %p53 = scmp.ne.s32.totalorder %s45, %s47
      %p54 = scmp.eq.s32.totalorder %s16, 3
      %p55 = por %p53, %p54
      %p56 = scmp.ne.s32.totalorder %s47, %s48
      %p57 = scmp.eq.s32.totalorder %s16, 0
      %p58 = por %p56, %p57
      %p59 = scmp.ne.s32.totalorder %s47, %s48
      %p60 = scmp.eq.s32.totalorder %s17, 3
      %p61 = por %p59, %p60
      %p63 = scmp.ne.s32.totalorder %s48, %s62
      %p64 = scmp.eq.s32.totalorder %s17, 0
      %p65 = por %p63, %p64
      %s66 = ssub.s32 %s11, %s18
      %p67 = scmp.eq.s32.totalorder %s66, 0
      %s69 = sadd.s32 %s68, 1
      %s70 = scalar_select %p67, %s68, %s69
      %p73 = pneg %p67
      %p74 = scmp.eq.s32.totalorder %s11, 3
      %p75 = por %p73, %p74
      %p76 = scmp.ne.s32.totalorder %s68, %s71
      %p77 = scmp.eq.s32.totalorder %s11, 0
      %p78 = por %p76, %p77
      %p79 = scmp.ne.s32.totalorder %s68, %s71
      %p80 = scmp.eq.s32.totalorder %s16, 3
      %p81 = por %p79, %p80
      %p82 = scmp.ne.s32.totalorder %s71, %s72
      %p83 = scmp.eq.s32.totalorder %s16, 0
      %p84 = por %p82, %p83
      %p85 = scmp.ne.s32.totalorder %s71, %s72
      %p86 = scmp.eq.s32.totalorder %s17, 3
      %p87 = por %p85, %p86
      %p89 = scmp.ne.s32.totalorder %s72, %s88
      %p90 = scmp.eq.s32.totalorder %s17, 0
      %p91 = por %p89, %p90
      %p92 = scmp.le.s32.totalorder 1, %s11
      %p93 = scmp.lt.s32.totalorder %s11, 5
      %p94 = pnand %p92, %p93
      %p95 = pneg %p94
      // Predicated region
      $region9: #{tpu_custom_call.1} parent=5 // pred_check
        _
      $region10: #{tpu_custom_call.1} parent=5 // pred_check_branch
        %97 = sbr.rel (%p94) target = $region12
      $region11: #{tpu_custom_call.1} parent=5 // pred_region
        %s98 = ssub.s32 %s11, 1
        // Predicated region
        $region13: #{tpu_custom_call.1} parent=11 // pred_check
          %p99 = pneg %p58
        $region14: #{tpu_custom_call.1} parent=11 // pred_check_branch
          %101 = sbr.rel (%p99) target = $region16
        $region15: #{tpu_custom_call.1} parent=11 // pred_region
          _
        $region16: #{tpu_custom_call.1} parent=11 // pred_fallthru
          _
      $region12: #{tpu_custom_call.1} parent=5 // pred_fallthru
        _
      %p102 = scmp.lt.s32.totalorder %s11, 4
      // Predicated region
      $region17: #{tpu_custom_call.1} parent=5 // pred_check
        %p103 = pneg %p102
      $region18: #{tpu_custom_call.1} parent=5 // pred_check_branch
        %105 = sbr.rel (%p103) target = $region20
      $region19: #{tpu_custom_call.1} parent=5 // pred_region
        // Predicated region
        $region21: #{tpu_custom_call.1} parent=19 // pred_check
          %p106 = pneg %p31
        $region22: #{tpu_custom_call.1} parent=19 // pred_check_branch
          %108 = sbr.rel (%p106) target = $region24
        $region23: #{tpu_custom_call.1} parent=19 // pred_region
          %p109 = scmp.lt.s32.totalorder %s11, 3
          %s110 = scalar_select %p109, %s11, 3
          %s111 = smul.addr %s110, 2
          %s112 = scalar_lea.vmem %s0, %s111
        $region24: #{tpu_custom_call.1} parent=19 // pred_fallthru
          _
      $region20: #{tpu_custom_call.1} parent=5 // pred_fallthru
        _
      %p113 = scmp.le.s32.totalorder 1, %s11
      %p114 = scmp.lt.s32.totalorder %s11, 5
      %p115 = pnand %p113, %p114
      %p116 = pneg %p115
      // Predicated region
      $region25: #{tpu_custom_call.1} parent=5 // pred_check
        _
      $region26: #{tpu_custom_call.1} parent=5 // pred_check_branch
        %118 = sbr.rel (%p115) target = $region28
      $region27: #{tpu_custom_call.1} parent=5 // pred_region
        %s119 = ssub.s32 %s11, 1
        %p120 = scmp.lt.s32.totalorder %s16, 3
        %s121 = scalar_select %p120, %s16, 3
        %s122 = smul.addr %s121, 2
        %s123 = scalar_lea.vmem %s0, %s122
        %p124 = pneg %p37
        %p125 = pneg %p34
        %p126 = pneg %p58
        %p127 = pneg %p55
        %p128 = pneg %p84
        %p129 = pneg %p81
        %s130 = sand.u32 %s71, 1
        %s131 = scalar_lea.sflag [#allocation3], %s130
        %s132 = sand.u32 %s71, 1
        %s133 = smul.addr %s132, 4
        %s134 = scalar_lea.vmem [#allocation2], %s133
        %p135 = scmp.lt.s32.totalorder %s16, 3
        %s136 = scalar_select %p135, %s16, 3
        %s137 = smul.addr %s136, 2
        %s138 = scalar_lea.vmem %s0, %s137
        %v139 = vld [vmem:[%s138] sm:$0x3]
        %v140 = vmul.f32 %v139, 16.0
        %v141 = vcvt.f32.s32.to.zero.pseudo %v140
        %vm142 = vcmp.lt.s32.totalorder %v141, 0
        %v143 = vsub.s32 0, %v141
        %v144 = vsel %vm142, %v143, %v141
        %v145 = vshrl.u32 %v144, 1
        %v146 = vand.u32 %v144, 1
        %v147 = vsub.s32 0, %v146
        %v148 = vsel %vm142, %v147, %v146
        %vm149 = vcmp.ne.s32.totalorder %v148, 0
        %vm150 = vcmp.lt.s32.totalorder %v148, 0
        %vm151 = vmand %vm150, %vm149
        %v152 = vadd.s32 %v148, 2
        %v153 = vsel %vm151, %v152, %v148
        %v154 = vsub.s32 %v141, %v153
        %v155 = vcvt.s32.f32 %v154
        %v156 = vsub.f32 %v140, %v155
        %v157 = vrcp.pop 2.0
        %v158 = vmul.f32 %v156, %v157
        %vm159 = vcmp.gt.s32.totalorder %v154, 0
        %v160 = vsel %vm159, %v154, 0
        %vm161 = vcmp.lt.s32.totalorder %v160, 15
        %v162 = vsel %vm161, %v160, 15
        %v163 = vadd.s32 %v162, 2
        %vm164 = vcmp.lt.s32.totalorder %v163, 15
        %v165 = vsel %vm164, %v163, 15
        %v166 = vlaneseq
        %v167 = vshrl.u32 %v166, 7
        %v168 = vadd.s32 %v167, 8
        %v169 = vlaneseq
        %v170 = vshrl.u32 %v169, 7
        %v171 = vsub.s32 0, %v170
        %v172 = vrot.slane %v162, %v171
        %vm173 = vcmp.eq.s32.totalorder %v167, %v172
        %vm174 = vcmp.eq.s32.totalorder %v168, %v172
        %v175 = vsub.f32 1.0, %v158
        %v176 = vlaneseq
        %v177 = vshrl.u32 %v176, 7
        %v178 = vsub.s32 0, %v177
        %v179 = vrot.slane %v175, %v178
        %v180 = vsel %vm173, %v179, 0.0
        %v181 = vsel %vm174, %v179, 0.0
        %v182 = vlaneseq
        %v183 = vshrl.u32 %v182, 7
        %v184 = vsub.s32 0, %v183
        %v185 = vrot.slane %v165, %v184
        %vm186 = vcmp.eq.s32.totalorder %v167, %v185
        %vm187 = vcmp.eq.s32.totalorder %v168, %v185
        %v188 = vlaneseq
        %v189 = vshrl.u32 %v188, 7
        %v190 = vsub.s32 0, %v189
        %v191 = vrot.slane %v158, %v190
        %v192 = vsel %vm186, %v191, 0.0
        %v193 = vsel %vm187, %v191, 0.0
        %v194 = vadd.f32 %v180, %v192
        %v195 = vadd.f32 %v181, %v193
        %v196 = vlaneseq
        %v197 = vshrl.u32 %v196, 7
        %v198 = vsub.s32 1, %v197
        %v199 = vrot.slane %v162, %v198
        %vm200 = vcmp.eq.s32.totalorder %v167, %v199
        %vm201 = vcmp.eq.s32.totalorder %v168, %v199
        %v202 = vlaneseq
        %v203 = vshrl.u32 %v202, 7
        %v204 = vsub.s32 1, %v203
        %v205 = vrot.slane %v175, %v204
        %v206 = vsel %vm200, %v205, 0.0
        %v207 = vsel %vm201, %v205, 0.0
        %v208 = vlaneseq
        %v209 = vshrl.u32 %v208, 7
        %v210 = vsub.s32 1, %v209
        %v211 = vrot.slane %v165, %v210
        %vm212 = vcmp.eq.s32.totalorder %v167, %v211
        %vm213 = vcmp.eq.s32.totalorder %v168, %v211
        %v214 = vlaneseq
        %v215 = vshrl.u32 %v214, 7
        %v216 = vsub.s32 1, %v215
        %v217 = vrot.slane %v158, %v216
        %v218 = vsel %vm212, %v217, 0.0
        %v219 = vsel %vm213, %v217, 0.0
        %v220 = vadd.f32 %v206, %v218
        %v221 = vadd.f32 %v207, %v219
        %v222 = vld [vmem:[%s1] sm:$0xff]
        %v223 = vld [vmem:[%s1 + $0x8] sm:$0xff]
        %v224 = vld [vmem:[%s1 + $0x10] sm:$0xff]
        %v225 = vld [vmem:[%s1 + $0x18] sm:$0xff]
        %v226 = vld [vmem:[%s1 + $0x20] sm:$0xff]
        %v227 = vld [vmem:[%s1 + $0x28] sm:$0xff]
        %vm228 = vcmask 130048
        %v230 = vsel %vm228, %v222, 0
        %v233 = vsel %vm228, %v223, 0
        %v236 = vsel %vm228, %v224, 0
        %v239 = vsel %vm228, %v225, 0
        %v242 = vsel %vm228, %v226, 0
        %v245 = vsel %vm228, %v227, 0
        %247 = vmatprep.subr.mxu0 0.0
        %248 = vmatpush1.msra.mxu0 %v194
        %249 = vmatprep.subr.mxu0 0.0
        %250 = vmatpush1.msra.mxu0 %v195
        %251 = vmatprep.subr.mxu0 0.0
        %252 = vmatpush1.msra.mxu0 0.0
        %253 = vmatprep.subr.mxu0 0.0
        %254 = vmatpush1.msra.mxu0 0.0
        %255 = vmatprep.subr.mxu0 0.0
        %256 = vmatpush1.msra.mxu0 0.0
        %257 = vmatprep.subr.mxu0 0.0
        %258 = vmatpush1.msra.mxu0 0.0
        %259 = vmatprep.subr.mxu0 0.0
        %260 = vmatpush1.msra.mxu0 0.0
        %261 = vmatprep.subr.mxu0 0.0
        %262 = vmatpush1.msra.mxu0 0.0
        %263 = vmatprep.subr.mxu0 0.0
        %264 = vmatpush1.msra.mxu0 0.0
        %265 = vmatprep.subr.mxu0 0.0
        %266 = vmatpush1.msra.mxu0 0.0
        %267 = vmatprep.subr.mxu0 0.0
        %268 = vmatpush1.msra.mxu0 0.0
        %269 = vmatprep.subr.mxu0 0.0
        %270 = vmatpush1.msra.mxu0 0.0
        %271 = vmatprep.subr.mxu0 0.0
        %272 = vmatpush1.msra.mxu0 0.0
        %273 = vmatprep.subr.mxu0 0.0
        %274 = vmatpush1.msra.mxu0 0.0
        %275 = vmatprep.subr.mxu0 0.0
        %276 = vmatpush1.msra.mxu0 0.0
        %277 = vmatprep.subr.mxu0 0.0
        %278 = vmatpush1.msra.mxu0 0.0
        %279 = vmatprep.subr.mxu0 0.0
        %280 = vmatpush1.msra.mxu0 0.0
        %281 = vmatprep.subr.mxu0 0.0
        %282 = vmatpush1.msra.mxu0 0.0
        %283 = vmatprep.subr.mxu0 0.0
        %284 = vmatpush1.msra.mxu0 0.0
        %285 = vmatprep.subr.mxu0 0.0
        %286 = vmatpush1.msra.mxu0 0.0
        %287 = vmatprep.subr.mxu0 0.0
        %288 = vmatpush1.msra.mxu0 0.0
        %289 = vmatprep.subr.mxu0 0.0
        %290 = vmatpush1.msra.mxu0 0.0
        %291 = vmatprep.subr.mxu0 0.0
        %292 = vmatpush1.msra.mxu0 0.0
        %293 = vmatprep.subr.mxu0 0.0
        %294 = vmatpush1.msra.mxu0 0.0
        %295 = vmatprep.subr.mxu0 0.0
        %296 = vmatpush1.msra.mxu0 0.0
        %297 = vmatprep.subr.mxu0 0.0
        %298 = vmatpush1.msra.mxu0 0.0
        %299 = vmatprep.subr.mxu0 0.0
        %300 = vmatpush1.msra.mxu0 0.0
        %301 = vmatprep.subr.mxu0 0.0
        %302 = vmatpush1.msra.mxu0 0.0
        %303 = vmatprep.subr.mxu0 0.0
        %304 = vmatpush1.msra.mxu0 0.0
        %305 = vmatprep.subr.mxu0 0.0
        %306 = vmatpush1.msra.mxu0 0.0
        %307 = vmatprep.subr.mxu0 0.0
        %308 = vmatpush1.msra.mxu0 0.0
        %309 = vmatprep.subr.mxu0 0.0
        %310 = vmatpush1.msra.mxu0 0.0
        %311 = vmatprep.mubr.f32.mxu0 0.0
        %312 = vmatmul.mubr.f32.gmra.mrb[0].mxu0 %v230
        %v313 = vpop.f32.mrb[0].mxu0
        %v314 = vadd.f32 0.0, %v313
        %v315 = vpop.f32.mrb[0].mxu0
        %316 = vmatprep.mubr.f32.mxu0 0.0
        %317 = vmatmul.mubr.f32.gmra.mrb[0].mxu0 %v233
        %v318 = vpop.f32.mrb[0].mxu0
        %v319 = vadd.f32 0.0, %v318
        %v320 = vpop.f32.mrb[0].mxu0
        %321 = vmatprep.mubr.f32.mxu0 0.0
        %322 = vmatmul.mubr.f32.gmra.mrb[0].mxu0 %v236
        %v323 = vpop.f32.mrb[0].mxu0
        %v324 = vadd.f32 0.0, %v323
        %v325 = vpop.f32.mrb[0].mxu0
        %326 = vmatprep.mubr.f32.mxu0 0.0
        %327 = vmatmul.mubr.f32.gmra.mrb[0].mxu0 %v239
        %v328 = vpop.f32.mrb[0].mxu0
        %v329 = vadd.f32 0.0, %v328
        %v330 = vpop.f32.mrb[0].mxu0
        %331 = vmatprep.mubr.f32.mxu0 0.0
        %332 = vmatmul.mubr.f32.gmra.mrb[0].mxu0 %v242
        %v333 = vpop.f32.mrb[0].mxu0
        %v334 = vadd.f32 0.0, %v333
        %v335 = vpop.f32.mrb[0].mxu0
        %336 = vmatprep.mubr.f32.mxu0 0.0
        %337 = vmatmul.mubr.f32.gmra.mrb[0].mxu0 %v245
        %v338 = vpop.f32.mrb[0].mxu0
        %v339 = vadd.f32 0.0, %v338
        %v340 = vpop.f32.mrb[0].mxu0
        %341 = vdwg.mxu0
        %v342 = vmul.f32 %v314, %v220
        %v343 = vmul.f32 %v319, %v221
        %v344 = vmul.f32 %v324, %v220
        %v345 = vmul.f32 %v329, %v221
        %v346 = vmul.f32 %v334, %v220
        %v347 = vmul.f32 %v339, %v221
        %v348 = vadd.f32 %v342, %v343
        %v349 = vrot.slane %v348, 4
        %v350 = vadd.f32 %v348, %v349
        %v351 = vrot.slane %v350, 2
        %v352 = vadd.f32 %v350, %v351
        %v353 = vrot.slane %v352, 1
        %v354 = vadd.f32 %v352, %v353
        %v355 = vadd.f32 %v344, %v345
        %v356 = vrot.slane %v355, 4
        %v357 = vadd.f32 %v355, %v356
        %v358 = vrot.slane %v357, 2
        %v359 = vadd.f32 %v357, %v358
        %v360 = vrot.slane %v359, 1
        %v361 = vadd.f32 %v359, %v360
        %v362 = vadd.f32 %v346, %v347
        %v363 = vrot.slane %v362, 4
        %v364 = vadd.f32 %v362, %v363
        %v365 = vrot.slane %v364, 2
        %v366 = vadd.f32 %v364, %v365
        %v367 = vrot.slane %v366, 1
        %v368 = vadd.f32 %v366, %v367
        %vm372 = vcmask 1041409
        %v373 = vsel %vm372, %v361, %v354
        %vm374 = vcmask 1042434
        %v375 = vsel %vm374, %v368, %v373
        %377 = vst [vmem:[%s134] sm:$0x7] %v375
        %s378 = sand.u32 %s71, 1
        %s379 = scalar_lea.sflag [#allocation3], %s378
        %s380 = sand.u32 %s71, 1
        %s381 = smul.addr %s380, 4
        %s382 = scalar_lea.vmem [#allocation2], %s381
        // Predicated region
        $region29: #{tpu_custom_call.1} parent=27 // pred_check
          %p383 = pneg %p81
        $region30: #{tpu_custom_call.1} parent=27 // pred_check_branch
          %385 = sbr.rel (%p383) target = $region32
        $region31: #{tpu_custom_call.1} parent=27 // pred_region
          %s387 = ssub.s32 64, 64
          %388 = vsyncadd %s379, %s387
          %s389 = smul.addr %s16, 64
          %s390 = scalar_lea.hbm %s2, %s389
          %s392 = sshll.u32 %s382, 4
          %s393 = int_to_ptr.vmem [resolvable:$true] %s392
          %395 = dma.vmem_to_hbm [thread:$0]  %s393, 64, %s390, %s379
        $region32: #{tpu_custom_call.1} parent=27 // pred_fallthru
          _
      $region28: #{tpu_custom_call.1} parent=5 // pred_fallthru
        _
      %p396 = scmp.le.s32.totalorder 2, %s11
      // Predicated region
      $region33: #{tpu_custom_call.1} parent=5 // pred_check
        %p397 = pneg %p396
      $region34: #{tpu_custom_call.1} parent=5 // pred_check_branch
        %399 = sbr.rel (%p397) target = $region36
      $region35: #{tpu_custom_call.1} parent=5 // pred_region
        %s400 = ssub.s32 %s11, 2
        // Predicated region
        $region37: #{tpu_custom_call.1} parent=35 // pred_check
          %p401 = pneg %p87
        $region38: #{tpu_custom_call.1} parent=35 // pred_check_branch
          %403 = sbr.rel (%p401) target = $region40
        $region39: #{tpu_custom_call.1} parent=35 // pred_region
          %s404 = sand.u32 %s72, 1
          %s405 = scalar_lea.sflag [#allocation3], %s404
          %s406 = sand.u32 %s72, 1
          %s407 = smul.addr %s406, 4
          %s408 = scalar_lea.vmem [#allocation2], %s407
          %409 = dma.done %s405, 64
        $region40: #{tpu_custom_call.1} parent=35 // pred_fallthru
          _
      $region36: #{tpu_custom_call.1} parent=5 // pred_fallthru
        _
    $region6: #{tpu_custom_call.1} parent=1 // loop_footer
      %s15 = sadd.s32 1, %s11
    $region7: #{tpu_custom_call.1} parent=1 // loop_footer_branch
      %10 = sbr.rel target = $region3
    $region8: #{tpu_custom_call.1} parent=1 // loop_exit
      _
    %410 = vsyncpa [#allocation3], 1
    %s411 = scalar_lea.sflag [#allocation3], 1
    %412 = vsyncpa %s411, 1

</llo_original>
